<compile_context>
chip_gen: v5e
topology: v5e:2x2
jax: 0.10.0
libtpu: 0.0.40
codegen_flags: <defaults>
</compile_context>

<pallas_src>
import functools

import jax
import jax.numpy as jnp
from jax.experimental import pallas as pl
from jax.experimental.pallas import tpu as pltpu


def _logreg_kernel(x_ref, w_ref, b_ref, o_ref):
    # x_ref: (block_n, D) streamed tile (VMEM)
    # w_ref: (1, D) weight row, resident across the whole grid (VMEM)
    # b_ref: (1,) bias scalar (SMEM)
    # o_ref: (1, 1, block_n) lane-dense output row (VMEM)
    x = x_ref[...]
    w = w_ref[...]
    # GEMV as VPU multiply + XLU lane reduce; the MXU would be <=1/128 utilized here and
    # both VPU and XLU have plenty of slack in a memory-bound kernel.
    z = jnp.sum(x * w, axis=-1)                    # (block_n,) f32
    z = z[None, None, :] + b_ref[0]                # (1, 1, block_n), lane-dense
    # sigmoid(z) = 0.5 * (tanh(z/2) + 1): one EUP op, stable for all z, f32-accurate.
    o_ref[...] = (0.5 * jnp.tanh(0.5 * z) + 0.5).astype(o_ref.dtype)


def _pick_block_n(n, d, itemsize=4):
    """Rows per grid step: ~2 MiB x tile (near HBM roofline, cheap to double-buffer),
    multiple of 8; large batches are split into >= ~8 grid steps (but never below 128-row
    tiles) so the pipeline and v7x megacore stay busy; small batches use a single tile."""
    bytes_per_row = max(d * itemsize, 1)
    bn = max(8, (2 << 20) // bytes_per_row)        # ~2 MiB x tile
    bn = min(bn, max(128, n // 8))                 # multi-step grid on big batches
    n_pad8 = ((max(n, 1) + 7) // 8) * 8
    bn = min(bn, n_pad8)                           # never bigger than the (padded) batch
    return max(8, (bn // 8) * 8)


@functools.partial(jax.jit, static_argnames=("block_n",))
def logistic_regression(x, w, b, *, block_n=None):
    """x: (N, D) f32; w: reshapeable to (1, D) (Linear's (1, D) weight or its (D, 1)
    transpose); b: scalar / (1,) / (1, 1).  Returns sigmoid(x @ W^T + b) with shape (N, 1)."""
    N, D = x.shape
    x = x.astype(jnp.float32)
    w_row = jnp.reshape(w, (1, D)).astype(jnp.float32)
    b_vec = jnp.reshape(b, (1,)).astype(jnp.float32)

    bn = block_n if block_n is not None else _pick_block_n(N, D)
    bn = max(8, (bn // 8) * 8)
    grid_n = pl.cdiv(N, bn)
    n_pad = grid_n * bn
    if n_pad != N:  # pad ragged batches up to a whole number of tiles, sliced off below
        x = jnp.pad(x, ((0, n_pad - N), (0, 0)))

    out = pl.pallas_call(
        _logreg_kernel,
        out_shape=jax.ShapeDtypeStruct((grid_n, 1, bn), jnp.float32),
        grid_spec=pltpu.PrefetchScalarGridSpec(
            num_scalar_prefetch=0,
            grid=(grid_n,),
            in_specs=[
                # Streamed x tile (double-buffered by the BlockSpec pipeline).
                # pipeline_mode=pl.Buffered(3) is an option if DMA issue latency is exposed.
                pl.BlockSpec((bn, D), lambda i: (i, 0)),
                # Weight row, resident across the whole grid (constant block index).
                pl.BlockSpec((1, D), lambda i: (0, 0)),
                # Bias scalar in SMEM.
                pl.BlockSpec(memory_space=pltpu.MemorySpace.SMEM),
            ],
            out_specs=pl.BlockSpec((1, 1, bn), lambda i: (i, 0, 0)),
        ),
        compiler_params=pltpu.CompilerParams(
            dimension_semantics=("parallel",),          # shard batch axis across TCs on v7x
            vmem_limit_bytes=32 * 1024 * 1024,          # explicit; safe on v5e/v6e/v7x
        ),
        cost_estimate=pl.CostEstimate(
            flops=2 * n_pad * D,
            transcendentals=n_pad,                      # one tanh per row
            bytes_accessed=n_pad * D * 4 + n_pad * 4 + D * 4 + 4,
        ),
    )(x, w_row, b_vec)

    # Lane-dense (grid, 1, block_n) slab -> (N, 1) column, dropping any pad rows.
    return out.reshape(n_pad, 1)[:N]


if __name__ == "__main__":
    # Shapes consistent with LogisticRegression(D): feature dim D=32, batch big enough to
    # exercise a multi-step, pipelined grid (8 steps of 128 rows).
    D = 32
    N = 1024
    key = jax.random.PRNGKey(0)
    kx, kw, kb = jax.random.split(key, 3)

    x = jax.random.normal(kx, (N, D), dtype=jnp.float32)
    # Deterministic init mimicking torch.nn.Linear(D, 1): U(-1/sqrt(D), 1/sqrt(D)).
    bound = 1.0 / (D ** 0.5)
    w = jax.random.uniform(kw, (D, 1), dtype=jnp.float32, minval=-bound, maxval=bound)
    b = jax.random.uniform(kb, (1, 1), dtype=jnp.float32, minval=-bound, maxval=bound)

    out = jax.block_until_ready(logistic_regression(x, w, b))
    ref = jax.nn.sigmoid(x @ w + b)
    assert out.shape == (N, 1)
    assert jnp.allclose(out, ref, atol=1e-4, rtol=1e-4), float(jnp.max(jnp.abs(out - ref)))

    # Ragged batch exercises the pad-to-tile path (single 104-row tile).
    N2 = 100
    x2 = jax.random.normal(kx, (N2, D), dtype=jnp.float32)
    out2 = jax.block_until_ready(logistic_regression(x2, w, b))
    ref2 = jax.nn.sigmoid(x2 @ w + b)
    assert out2.shape == (N2, 1)
    assert jnp.allclose(out2, ref2, atol=1e-4, rtol=1e-4)

    print("KERNEL_OK")
</pallas_src>

<mosaic_0001>
module attributes {stable_mosaic.version = 11 : i64} {
  func.func @_logreg_kernel(%arg0: i32, %arg1: memref<128x32xf32, #tpu.memory_space<vmem>>, %arg2: memref<1x32xf32, #tpu.memory_space<vmem>>, %arg3: memref<1xf32, #tpu.memory_space<smem>>, %arg4: memref<1x1x128xf32, #tpu.memory_space<vmem>>) attributes {dimension_semantics = [#tpu.dimension_semantics<parallel>], iteration_bounds = array<i64: 8>, scalar_prefetch = 0 : i64, scratch_operands = 0 : i64, tpu.core_type = #tpu.core_type<tc>, window_params = [{transform_indices = @transform_0, window_bounds = array<i64: 128, 32>}, {pipeline_mode = #tpu.pipeline_mode<synchronous>, transform_indices = @transform_1, window_bounds = array<i64: 1, 32>}, {transform_indices = @transform_2, window_bounds = array<i64: 1>}, {transform_indices = @transform_3, window_bounds = array<i64: 1, 1, 128>}]} {
    %c0 = arith.constant 0 : index
    %c0_0 = arith.constant 0 : index
    %0 = vector.load %arg1[%c0, %c0_0] : memref<128x32xf32, #tpu.memory_space<vmem>>, vector<128x32xf32>
    %c0_1 = arith.constant 0 : index
    %c0_2 = arith.constant 0 : index
    %1 = vector.load %arg2[%c0_1, %c0_2] : memref<1x32xf32, #tpu.memory_space<vmem>>, vector<1x32xf32>
    %2 = vector.broadcast %1 : vector<1x32xf32> to vector<128x32xf32>
    %3 = arith.mulf %0, %2 : vector<128x32xf32>
    %cst = arith.constant dense<0.000000e+00> : vector<128xf32>
    %4 = vector.multi_reduction <add>, %3, %cst [1] : vector<128x32xf32> to vector<128xf32>
    %5 = vector.shape_cast %4 : vector<128xf32> to vector<1x1x128xf32>
    %c0_3 = arith.constant 0 : index
    %6 = memref.load %arg3[%c0_3] : memref<1xf32, #tpu.memory_space<smem>>
    %7 = vector.broadcast %6 : f32 to vector<1x1x128xf32>
    %8 = arith.addf %5, %7 : vector<1x1x128xf32>
    %cst_4 = arith.constant 5.000000e-01 : f32
    %9 = vector.broadcast %cst_4 : f32 to vector<1x1x128xf32>
    %10 = arith.mulf %9, %8 : vector<1x1x128xf32>
    %11 = math.tanh %10 : vector<1x1x128xf32>
    %cst_5 = arith.constant 5.000000e-01 : f32
    %12 = vector.broadcast %cst_5 : f32 to vector<1x1x128xf32>
    %13 = arith.mulf %12, %11 : vector<1x1x128xf32>
    %cst_6 = arith.constant 5.000000e-01 : f32
    %14 = vector.broadcast %cst_6 : f32 to vector<1x1x128xf32>
    %15 = arith.addf %13, %14 : vector<1x1x128xf32>
    %c0_7 = arith.constant 0 : index
    %c0_8 = arith.constant 0 : index
    %c0_9 = arith.constant 0 : index
    %16 = vector.load %arg4[%c0_7, %c0_8, %c0_9] : memref<1x1x128xf32, #tpu.memory_space<vmem>>, vector<1x1x128xf32>
    tpu.vector_store %arg4[%c0_7, %c0_8, %c0_9], %15 {strides = array<i32>} : memref<1x1x128xf32, #tpu.memory_space<vmem>>, vector<1x1x128xf32>,
    return
  }
  func.func @transform_0(%arg0: i32) -> (i32, i32) {
    %c0_i32 = arith.constant 0 : i32
    %c0_i32_0 = arith.constant 0 : i32
    return %arg0, %c0_i32 : i32, i32
  }
  func.func @transform_1(%arg0: i32) -> (i32, i32) {
    %c0_i32 = arith.constant 0 : i32
    %c0_i32_0 = arith.constant 0 : i32
    %c0_i32_1 = arith.constant 0 : i32
    return %c0_i32, %c0_i32_0 : i32, i32
  }
  func.func @transform_2(%arg0: i32) -> i32 {
    %c0_i32 = arith.constant 0 : i32
    %c0_i32_0 = arith.constant 0 : i32
    return %c0_i32 : i32
  }
  func.func @transform_3(%arg0: i32) -> (i32, i32, i32) {
    %c0_i32 = arith.constant 0 : i32
    %c0_i32_0 = arith.constant 0 : i32
    %c0_i32_1 = arith.constant 0 : i32
    return %arg0, %c0_i32, %c0_i32_0 : i32, i32, i32
  }
}

</mosaic_0001>

<llo_original>
// kernel: logistic_regression.1
$region0: #{logistic_regression.1}
  #allocation0 [shape = 'u32[]', space=smem, size = 0x4, offset = 0x4, fixed_abs, tag = 'smem constant byte address 0x4 - core index']
  #allocation1 [shape = 'u32[72,128]{1,0:T(1,128)}', space=vmem, size = 0x9000, scoped, tag = 'internal scratch']
  #allocation2 [shape = 'f32[1]{0:T(128)S(6)}', space=smem, size = 0x200, scoped, tag = 'scoped memory for logistic_regression.1']
  %s0 = inlined_call_operand.vmem [shape: f32[1024,32], index: 0, kind: input, shape index: {}]
  %s1 = inlined_call_operand.vmem [shape: f32[1,32], index: 1, kind: input, shape index: {}]
  %s2 = inlined_call_operand.<no memory space> [shape: f32[1], index: 2, kind: input, shape index: {}]
  %s3 = inlined_call_operand.hbm [shape: f32[8,1,128], index: 3, kind: output, shape index: {}]
  %s4 = sld [smem:[#allocation0]]
  $region45: #{logistic_regression.1} parent=0
    _
  %s6 = ssub.s32 1, %s4
  %s7 = scalar_select 0, %s6, %s4
  %8 = sst [smem:[#allocation2]] %s2
  $region1: #{logistic_regression.1} parent=0
    #allocation3 [shape = 'u8[1024]{0}', space=vmem, size = 0x400, scoped, tag = 'output window, operand 0']
    #allocation4 [shape = 's32[2]{0}', space=sflag, size = 0x8, scoped, tag = 'scoped memory for logistic_regression.1']
    %9 = vsyncpa [#allocation4], 0
    %s10 = scalar_lea.sflag [#allocation4], 1
    %11 = vsyncpa %s10, 0
    loop: start=0, step=1, limit=10
    $region2: #{logistic_regression.1} parent=1 // loop_pre_header
      _
    $region3: #{logistic_regression.1} parent=1 // loop_header
      %s13 = sphi 0, %s17
      %p14 = scmp.ge.s32.totalorder %s13, 10
      %s23 = sphi 0, %s25
      %s26 = sphi 0, %s23
      %s27 = sphi 0, %s26
      %s43 = sphi 0, %s27
      %s47 = sphi 0, %s47
      %s49 = sphi 0, %s47
      %s50 = sphi 0, %s49
      %s64 = sphi 0, %s50
      %s68 = sphi 0, %s68
      %s70 = sphi 0, %s68
      %s71 = sphi 0, %s70
      %s85 = sphi 0, %s71
      %s91 = sphi 0, %s93
      %s94 = sphi 0, %s91
      %s95 = sphi 0, %s94
      %s111 = sphi 0, %s95
    $region4: #{logistic_regression.1} parent=1 // loop_header_branch
      %16 = sbr.rel (%p14) target = $region8
    $region5: #{logistic_regression.1} parent=1 // loop_body
      %s18 = ssub.s32 %s13, 1
      %s19 = ssub.s32 %s13, 2
      %s20 = sadd.s32 %s13, 1
      %s21 = ssub.s32 %s13, %s20
      %p22 = scmp.eq.s32.totalorder %s21, 0
      %s24 = sadd.s32 %s23, 1
      %s25 = scalar_select %p22, %s23, %s24
      %p28 = pneg %p22
      %p29 = scmp.eq.s32.totalorder %s13, 7
      %p30 = por %p28, %p29
      %p31 = scmp.ne.s32.totalorder %s23, %s26
      %p32 = scmp.eq.s32.totalorder %s13, 0
      %p33 = por %p31, %p32
      %p34 = scmp.ne.s32.totalorder %s23, %s26
      %p35 = scmp.eq.s32.totalorder %s18, 7
      %p36 = por %p34, %p35
      %p37 = scmp.ne.s32.totalorder %s26, %s27
      %p38 = scmp.eq.s32.totalorder %s18, 0
      %p39 = por %p37, %p38
      %p40 = scmp.ne.s32.totalorder %s26, %s27
      %p41 = scmp.eq.s32.totalorder %s19, 7
      %p42 = por %p40, %p41
      %p44 = scmp.ne.s32.totalorder %s27, %s43
      %p45 = scmp.eq.s32.totalorder %s19, 0
      %p46 = por %p44, %p45
      %s48 = sadd.s32 %s47, 1
      %p51 = scmp.eq.s32.totalorder %s13, 7
      %p52 = scmp.ne.s32.totalorder %s47, %s49
      %p53 = scmp.eq.s32.totalorder %s13, 0
      %p54 = por %p52, %p53
      %p55 = scmp.ne.s32.totalorder %s47, %s49
      %p56 = scmp.eq.s32.totalorder %s18, 7
      %p57 = por %p55, %p56
      %p58 = scmp.ne.s32.totalorder %s49, %s50
      %p59 = scmp.eq.s32.totalorder %s18, 0
      %p60 = por %p58, %p59
      %p61 = scmp.ne.s32.totalorder %s49, %s50
      %p62 = scmp.eq.s32.totalorder %s19, 7
      %p63 = por %p61, %p62
      %p65 = scmp.ne.s32.totalorder %s50, %s64
      %p66 = scmp.eq.s32.totalorder %s19, 0
      %p67 = por %p65, %p66
      %s69 = sadd.s32 %s68, 1
      %p72 = scmp.eq.s32.totalorder %s13, 7
      %p73 = scmp.ne.s32.totalorder %s68, %s70
      %p74 = scmp.eq.s32.totalorder %s13, 0
      %p75 = por %p73, %p74
      %p76 = scmp.ne.s32.totalorder %s68, %s70
      %p77 = scmp.eq.s32.totalorder %s18, 7
      %p78 = por %p76, %p77
      %p79 = scmp.ne.s32.totalorder %s70, %s71
      %p80 = scmp.eq.s32.totalorder %s18, 0
      %p81 = por %p79, %p80
      %p82 = scmp.ne.s32.totalorder %s70, %s71
      %p83 = scmp.eq.s32.totalorder %s19, 7
      %p84 = por %p82, %p83
      %p86 = scmp.ne.s32.totalorder %s71, %s85
      %p87 = scmp.eq.s32.totalorder %s19, 0
      %p88 = por %p86, %p87
      %s89 = ssub.s32 %s13, %s20
      %p90 = scmp.eq.s32.totalorder %s89, 0
      %s92 = sadd.s32 %s91, 1
      %s93 = scalar_select %p90, %s91, %s92
      %p96 = pneg %p90
      %p97 = scmp.eq.s32.totalorder %s13, 7
      %p98 = por %p96, %p97
      %p99 = scmp.ne.s32.totalorder %s91, %s94
      %p100 = scmp.eq.s32.totalorder %s13, 0
      %p101 = por %p99, %p100
      %p102 = scmp.ne.s32.totalorder %s91, %s94
      %p103 = scmp.eq.s32.totalorder %s18, 7
      %p104 = por %p102, %p103
      %p105 = scmp.ne.s32.totalorder %s94, %s95
      %p106 = scmp.eq.s32.totalorder %s18, 0
      %p107 = por %p105, %p106
      %p108 = scmp.ne.s32.totalorder %s94, %s95
      %p109 = scmp.eq.s32.totalorder %s19, 7
      %p110 = por %p108, %p109
      %p112 = scmp.ne.s32.totalorder %s95, %s111
      %p113 = scmp.eq.s32.totalorder %s19, 0
      %p114 = por %p112, %p113
      %p115 = scmp.le.s32.totalorder 1, %s13
      %p116 = scmp.lt.s32.totalorder %s13, 9
      %p117 = pnand %p115, %p116
      %p118 = pneg %p117
      // Predicated region
      $region9: #{logistic_regression.1} parent=5 // pred_check
        _
      $region10: #{logistic_regression.1} parent=5 // pred_check_branch
        %120 = sbr.rel (%p117) target = $region12
      $region11: #{logistic_regression.1} parent=5 // pred_region
        %s121 = ssub.s32 %s13, 1
        // Predicated region
        $region13: #{logistic_regression.1} parent=11 // pred_check
          %p122 = pneg %p60
        $region14: #{logistic_regression.1} parent=11 // pred_check_branch
          %124 = sbr.rel (%p122) target = $region16
        $region15: #{logistic_regression.1} parent=11 // pred_region
          _
        $region16: #{logistic_regression.1} parent=11 // pred_fallthru
          _
        // Predicated region
        $region17: #{logistic_regression.1} parent=11 // pred_check
          %p125 = pneg %p81
        $region18: #{logistic_regression.1} parent=11 // pred_check_branch
          %127 = sbr.rel (%p125) target = $region20
        $region19: #{logistic_regression.1} parent=11 // pred_region
          _
        $region20: #{logistic_regression.1} parent=11 // pred_fallthru
          _
      $region12: #{logistic_regression.1} parent=5 // pred_fallthru
        _
      %p128 = scmp.lt.s32.totalorder %s13, 8
      // Predicated region
      $region21: #{logistic_regression.1} parent=5 // pred_check
        %p129 = pneg %p128
      $region22: #{logistic_regression.1} parent=5 // pred_check_branch
        %131 = sbr.rel (%p129) target = $region24
      $region23: #{logistic_regression.1} parent=5 // pred_region
        // Predicated region
        $region25: #{logistic_regression.1} parent=23 // pred_check
          %p132 = pneg %p33
        $region26: #{logistic_regression.1} parent=23 // pred_check_branch
          %134 = sbr.rel (%p132) target = $region28
        $region27: #{logistic_regression.1} parent=23 // pred_region
          %s135 = smul.u32 16, %s13
          %p136 = scmp.lt.s32.totalorder %s135, 127
          %s137 = scalar_select %p136, %s135, 127
          %s138 = smul.addr %s137, 8
          %s139 = scalar_lea.vmem %s0, %s138
          %s140 = smul.u32 16, %s13
        $region28: #{logistic_regression.1} parent=23 // pred_fallthru
          _
      $region24: #{logistic_regression.1} parent=5 // pred_fallthru
        _
      %p141 = scmp.le.s32.totalorder 1, %s13
      %p142 = scmp.lt.s32.totalorder %s13, 9
      %p143 = pnand %p141, %p142
      %p144 = pneg %p143
      // Predicated region
      $region29: #{logistic_regression.1} parent=5 // pred_check
        _
      $region30: #{logistic_regression.1} parent=5 // pred_check_branch
        %146 = sbr.rel (%p143) target = $region32
      $region31: #{logistic_regression.1} parent=5 // pred_region
        %s147 = ssub.s32 %s13, 1
        %s148 = smul.u32 16, %s18
        %p149 = scmp.lt.s32.totalorder %s148, 127
        %s150 = scalar_select %p149, %s148, 127
        %s151 = smul.addr %s150, 8
        %s152 = scalar_lea.vmem %s0, %s151
        %p153 = pneg %p39
        %p154 = pneg %p36
        %p155 = pneg %p60
        %p156 = pneg %p57
        %p157 = pneg %p81
        %p158 = pneg %p78
        %p159 = pneg %p107
        %p160 = pneg %p104
        %s161 = sand.u32 %s94, 1
        %s162 = scalar_lea.sflag [#allocation4], %s161
        %s163 = sand.u32 %s94, 1
        %s164 = scalar_lea.vmem [#allocation3], %s163
        %s165 = smul.u32 16, %s18
        %p166 = scmp.lt.s32.totalorder %s165, 127
        %s167 = scalar_select %p166, %s165, 127
        %s168 = smul.addr %s167, 8
        %s169 = scalar_lea.vmem %s0, %s168
        %s170 = smul.u32 16, %s18
        %v171 = vld [vmem:[%s169] sm:$0xff]
        %v172 = vld [vmem:[%s169 + $0x8] sm:$0xff]
        %v173 = vld [vmem:[%s169 + $0x10] sm:$0xff]
        %v174 = vld [vmem:[%s169 + $0x18] sm:$0xff]
        %v175 = vld [vmem:[%s169 + $0x20] sm:$0xff]
        %v176 = vld [vmem:[%s169 + $0x28] sm:$0xff]
        %v177 = vld [vmem:[%s169 + $0x30] sm:$0xff]
        %v178 = vld [vmem:[%s169 + $0x38] sm:$0xff]
        %v179 = vld [vmem:[%s169 + $0x40] sm:$0xff]
        %v180 = vld [vmem:[%s169 + $0x48] sm:$0xff]
        %v181 = vld [vmem:[%s169 + $0x50] sm:$0xff]
        %v182 = vld [vmem:[%s169 + $0x58] sm:$0xff]
        %v183 = vld [vmem:[%s169 + $0x60] sm:$0xff]
        %v184 = vld [vmem:[%s169 + $0x68] sm:$0xff]
        %v185 = vld [vmem:[%s169 + $0x70] sm:$0xff]
        %v186 = vld [vmem:[%s169 + $0x78] sm:$0xff]
        %v187 = vld [vmem:[%s1] sm:$0x1]
        %v189 = vperm.slane %v187, 0
        %v191 = vmul.f32 %v171, %v189
        %v192 = vmul.f32 %v172, %v189
        %v193 = vmul.f32 %v173, %v189
        %v194 = vmul.f32 %v174, %v189
        %v195 = vmul.f32 %v175, %v189
        %v196 = vmul.f32 %v176, %v189
        %v197 = vmul.f32 %v177, %v189
        %v198 = vmul.f32 %v178, %v189
        %v199 = vmul.f32 %v179, %v189
        %v200 = vmul.f32 %v180, %v189
        %v201 = vmul.f32 %v181, %v189
        %v202 = vmul.f32 %v182, %v189
        %v203 = vmul.f32 %v183, %v189
        %v204 = vmul.f32 %v184, %v189
        %v205 = vmul.f32 %v185, %v189
        %v206 = vmul.f32 %v186, %v189
        %vm207 = vcmask 261120
        %v208 = vsel %vm207, %v191, 0.0
        %209 = vadd.xlane.f32.xlu0 %v208
        %v210 = vpop.xlane.xlu0 %209
        %v211 = vsel %vm207, %v192, 0.0
        %212 = vadd.xlane.f32.xlu0 %v211
        %v213 = vpop.xlane.xlu0 %212
        %v214 = vsel %vm207, %v193, 0.0
        %215 = vadd.xlane.f32.xlu0 %v214
        %v216 = vpop.xlane.xlu0 %215
        %v217 = vsel %vm207, %v194, 0.0
        %218 = vadd.xlane.f32.xlu0 %v217
        %v219 = vpop.xlane.xlu0 %218
        %v220 = vsel %vm207, %v195, 0.0
        %221 = vadd.xlane.f32.xlu0 %v220
        %v222 = vpop.xlane.xlu0 %221
        %v223 = vsel %vm207, %v196, 0.0
        %224 = vadd.xlane.f32.xlu0 %v223
        %v225 = vpop.xlane.xlu0 %224
        %v226 = vsel %vm207, %v197, 0.0
        %227 = vadd.xlane.f32.xlu0 %v226
        %v228 = vpop.xlane.xlu0 %227
        %v229 = vsel %vm207, %v198, 0.0
        %230 = vadd.xlane.f32.xlu0 %v229
        %v231 = vpop.xlane.xlu0 %230
        %v232 = vsel %vm207, %v199, 0.0
        %233 = vadd.xlane.f32.xlu0 %v232
        %v234 = vpop.xlane.xlu0 %233
        %v235 = vsel %vm207, %v200, 0.0
        %236 = vadd.xlane.f32.xlu0 %v235
        %v237 = vpop.xlane.xlu0 %236
        %v238 = vsel %vm207, %v201, 0.0
        %239 = vadd.xlane.f32.xlu0 %v238
        %v240 = vpop.xlane.xlu0 %239
        %v241 = vsel %vm207, %v202, 0.0
        %242 = vadd.xlane.f32.xlu0 %v241
        %v243 = vpop.xlane.xlu0 %242
        %v244 = vsel %vm207, %v203, 0.0
        %245 = vadd.xlane.f32.xlu0 %v244
        %v246 = vpop.xlane.xlu0 %245
        %v247 = vsel %vm207, %v204, 0.0
        %248 = vadd.xlane.f32.xlu0 %v247
        %v249 = vpop.xlane.xlu0 %248
        %v250 = vsel %vm207, %v205, 0.0
        %251 = vadd.xlane.f32.xlu0 %v250
        %v252 = vpop.xlane.xlu0 %251
        %v253 = vsel %vm207, %v206, 0.0
        %254 = vadd.xlane.f32.xlu0 %v253
        %v255 = vpop.xlane.xlu0 %254
        %s256 = sld [smem:[#allocation2]]
        %v257 = vstv %s256
        %v258 = vadd.f32 %v210, %v257
        %v259 = vadd.f32 %v213, %v257
        %v260 = vadd.f32 %v216, %v257
        %v261 = vadd.f32 %v219, %v257
        %v262 = vadd.f32 %v222, %v257
        %v263 = vadd.f32 %v225, %v257
        %v264 = vadd.f32 %v228, %v257
        %v265 = vadd.f32 %v231, %v257
        %v266 = vadd.f32 %v234, %v257
        %v267 = vadd.f32 %v237, %v257
        %v268 = vadd.f32 %v240, %v257
        %v269 = vadd.f32 %v243, %v257
        %v270 = vadd.f32 %v246, %v257
        %v271 = vadd.f32 %v249, %v257
        %v272 = vadd.f32 %v252, %v257
        %v273 = vadd.f32 %v255, %v257
        %v274 = vmul.f32 %v258, 0.5
        %v275 = vmul.f32 %v259, 0.5
        %v276 = vmul.f32 %v260, 0.5
        %v277 = vmul.f32 %v261, 0.5
        %v278 = vmul.f32 %v262, 0.5
        %v279 = vmul.f32 %v263, 0.5
        %v280 = vmul.f32 %v264, 0.5
        %v281 = vmul.f32 %v265, 0.5
        %v282 = vmul.f32 %v266, 0.5
        %v283 = vmul.f32 %v267, 0.5
        %v284 = vmul.f32 %v268, 0.5
        %v285 = vmul.f32 %v269, 0.5
        %v286 = vmul.f32 %v270, 0.5
        %v287 = vmul.f32 %v271, 0.5
        %v288 = vmul.f32 %v272, 0.5
        %v289 = vmul.f32 %v273, 0.5
        %v290 = vtanh.pop %v274
        %v291 = vtanh.pop %v275
        %v292 = vtanh.pop %v276
        %v293 = vtanh.pop %v277
        %v294 = vtanh.pop %v278
        %v295 = vtanh.pop %v279
        %v296 = vtanh.pop %v280
        %v297 = vtanh.pop %v281
        %v298 = vtanh.pop %v282
        %v299 = vtanh.pop %v283
        %v300 = vtanh.pop %v284
        %v301 = vtanh.pop %v285
        %v302 = vtanh.pop %v286
        %v303 = vtanh.pop %v287
        %v304 = vtanh.pop %v288
        %v305 = vtanh.pop %v289
        %v306 = vmul.f32 %v290, 0.5
        %v307 = vmul.f32 %v291, 0.5
        %v308 = vmul.f32 %v292, 0.5
        %v309 = vmul.f32 %v293, 0.5
        %v310 = vmul.f32 %v294, 0.5
        %v311 = vmul.f32 %v295, 0.5
        %v312 = vmul.f32 %v296, 0.5
        %v313 = vmul.f32 %v297, 0.5
        %v314 = vmul.f32 %v298, 0.5
        %v315 = vmul.f32 %v299, 0.5
        %v316 = vmul.f32 %v300, 0.5
        %v317 = vmul.f32 %v301, 0.5
        %v318 = vmul.f32 %v302, 0.5
        %v319 = vmul.f32 %v303, 0.5
        %v320 = vmul.f32 %v304, 0.5
        %v321 = vmul.f32 %v305, 0.5
        %v322 = vadd.f32 %v306, 0.5
        %v323 = vadd.f32 %v307, 0.5
        %v324 = vadd.f32 %v308, 0.5
        %v325 = vadd.f32 %v309, 0.5
        %v326 = vadd.f32 %v310, 0.5
        %v327 = vadd.f32 %v311, 0.5
        %v328 = vadd.f32 %v312, 0.5
        %v329 = vadd.f32 %v313, 0.5
        %v330 = vadd.f32 %v314, 0.5
        %v331 = vadd.f32 %v315, 0.5
        %v332 = vadd.f32 %v316, 0.5
        %v333 = vadd.f32 %v317, 0.5
        %v334 = vadd.f32 %v318, 0.5
        %v335 = vadd.f32 %v319, 0.5
        %v336 = vadd.f32 %v320, 0.5
        %v337 = vadd.f32 %v321, 0.5
        %v354 = vlaneseq
        %v355 = vand.u32 %v354, 127
        %v356 = vperm.slane %v322, %v355
        %v357 = vadd.s32 %v355, 4294967288
        %v358 = vperm.slane %v323, %v357
        %vm359 = vcmask 130112
        %v360 = vsel %vm359, %v358, %v356
        %v361 = vadd.s32 %v355, 4294967280
        %v362 = vperm.slane %v324, %v361
        %vm363 = vcmask 195712
        %v364 = vsel %vm363, %v362, %v360
        %v365 = vadd.s32 %v355, 4294967272
        %v366 = vperm.slane %v325, %v365
        %vm367 = vcmask 261312
        %v368 = vsel %vm367, %v366, %v364
        %v369 = vadd.s32 %v355, 4294967264
        %v370 = vperm.slane %v326, %v369
        %vm371 = vcmask 326912
        %v372 = vsel %vm371, %v370, %v368
        %v373 = vadd.s32 %v355, 4294967256
        %v374 = vperm.slane %v327, %v373
        %vm375 = vcmask 392512
        %v376 = vsel %vm375, %v374, %v372
        %v377 = vadd.s32 %v355, 4294967248
        %v378 = vperm.slane %v328, %v377
        %vm379 = vcmask 458112
        %v380 = vsel %vm379, %v378, %v376
        %v381 = vadd.s32 %v355, 4294967240
        %v382 = vperm.slane %v329, %v381
        %vm383 = vcmask 523712
        %v384 = vsel %vm383, %v382, %v380
        %v385 = vadd.s32 %v355, 4294967232
        %v386 = vperm.slane %v330, %v385
        %vm387 = vcmask 589312
        %v388 = vsel %vm387, %v386, %v384
        %v389 = vadd.s32 %v355, 4294967224
        %v390 = vperm.slane %v331, %v389
        %vm391 = vcmask 654912
        %v392 = vsel %vm391, %v390, %v388
        %v393 = vadd.s32 %v355, 4294967216
        %v394 = vperm.slane %v332, %v393
        %vm395 = vcmask 720512
        %v396 = vsel %vm395, %v394, %v392
        %v397 = vadd.s32 %v355, 4294967208
        %v398 = vperm.slane %v333, %v397
        %vm399 = vcmask 786112
        %v400 = vsel %vm399, %v398, %v396
        %v401 = vadd.s32 %v355, 4294967200
        %v402 = vperm.slane %v334, %v401
        %vm403 = vcmask 851712
        %v404 = vsel %vm403, %v402, %v400
        %v405 = vadd.s32 %v355, 4294967192
        %v406 = vperm.slane %v335, %v405
        %vm407 = vcmask 917312
        %v408 = vsel %vm407, %v406, %v404
        %v409 = vadd.s32 %v355, 4294967184
        %v410 = vperm.slane %v336, %v409
        %vm411 = vcmask 982912
        %v412 = vsel %vm411, %v410, %v408
        %v413 = vadd.s32 %v355, 4294967176
        %v414 = vperm.slane %v337, %v413
        %vm415 = vcmask 1048512
        %v416 = vsel %vm415, %v414, %v412
        %418 = vst [vmem:[%s164] sm:$0x1] %v416
        %s419 = sand.u32 %s94, 1
        %s420 = scalar_lea.sflag [#allocation4], %s419
        %s421 = sand.u32 %s94, 1
        %s422 = scalar_lea.vmem [#allocation3], %s421
        // Predicated region
        $region33: #{logistic_regression.1} parent=31 // pred_check
          %p423 = pneg %p104
        $region34: #{logistic_regression.1} parent=31 // pred_check_branch
          %425 = sbr.rel (%p423) target = $region36
        $region35: #{logistic_regression.1} parent=31 // pred_region
          %427 = vsyncadd %s420, 0
          %s428 = scalar_lea.hbm %s3, %s18
          %s430 = sshll.u32 %s422, 4
          %s431 = int_to_ptr.vmem [resolvable:$true] %s430
          %s432 = sshll.u32 %s428, 4
          %s433 = int_to_ptr.hbm [resolvable:$true] %s432
          %435 = dma.vmem_to_hbm [thread:$0]  %s431, 16, %s433, %s420
        $region36: #{logistic_regression.1} parent=31 // pred_fallthru
          _
      $region32: #{logistic_regression.1} parent=5 // pred_fallthru
        _
      %p436 = scmp.le.s32.totalorder 2, %s13
      // Predicated region
      $region37: #{logistic_regression.1} parent=5 // pred_check
        %p437 = pneg %p436
      $region38: #{logistic_regression.1} parent=5 // pred_check_branch
        %439 = sbr.rel (%p437) target = $region40
      $region39: #{logistic_regression.1} parent=5 // pred_region
        %s440 = ssub.s32 %s13, 2
        // Predicated region
        $region41: #{logistic_regression.1} parent=39 // pred_check
          %p441 = pneg %p110
        $region42: #{logistic_regression.1} parent=39 // pred_check_branch
          %443 = sbr.rel (%p441) target = $region44
        $region43: #{logistic_regression.1} parent=39 // pred_region
          %s444 = sand.u32 %s95, 1
          %s445 = scalar_lea.sflag [#allocation4], %s444
          %s446 = sand.u32 %s95, 1
          %s447 = scalar_lea.vmem [#allocation3], %s446
          %449 = dma.done %s445, 16
        $region44: #{logistic_regression.1} parent=39 // pred_fallthru
          _
      $region40: #{logistic_regression.1} parent=5 // pred_fallthru
        _
    $region6: #{logistic_regression.1} parent=1 // loop_footer
      %s17 = sadd.s32 1, %s13
    $region7: #{logistic_regression.1} parent=1 // loop_footer_branch
      %12 = sbr.rel target = $region3
    $region8: #{logistic_regression.1} parent=1 // loop_exit
      _
    %450 = vsyncpa [#allocation4], 1
    %s451 = scalar_lea.sflag [#allocation4], 1
    %452 = vsyncpa %s451, 1

</llo_original>
